<compile_context>
chip_gen: v7x
topology: tpu7x:2x2x1
jax: 0.10.0
libtpu: 0.0.40
codegen_flags: <defaults>
</compile_context>

<pallas_src>
import jax
import jax.numpy as jnp
import numpy as np
from jax.experimental import pallas as pl
from jax.experimental.pallas import tpu as pltpu  # noqa: F401  (kept for scaling variants)


def _maxout_conv_kernel(x_ref, w_ref, o_ref):
    # x_ref: (K+1, N*HW)  im2col patches (+ ones row for the bias), lanes ordered (n, ho, wo)
    # w_ref: (Cout, K+1)  flattened conv weights with the bias column appended
    # o_ref: (1, N*HW)    channel-max (maxout) result, lane-dense
    z = jnp.dot(w_ref[...], x_ref[...], preferred_element_type=jnp.float32)  # (Cout, N*HW)
    o_ref[...] = jnp.max(z, axis=0, keepdims=True).astype(o_ref.dtype)       # sublane max


def maxout_conv(x_nchw, w_oihw, b, padding):
    """Pallas implementation of MaxoutConv.forward(x, is_norm=False)."""
    N, Cin, H, W = x_nchw.shape
    Cout, _, KH, KW = w_oihw.shape
    ph, pw = padding
    Ho, Wo = H + 2 * ph - KH + 1, W + 2 * pw - KW + 1
    HW = Ho * Wo
    NHW = N * HW
    K = KH * KW * Cin

    # Wrapper glue (plain XLA, off the kernel critical path):
    # pad + im2col -> (K, N*HW) with K ordered (kh, kw, cin) and lanes ordered (n, ho, wo),
    # then append a ones row so the conv bias becomes one extra contraction row (free in
    # layout: K=36 already pads to 40 sublanes).
    x_pad = jnp.pad(x_nchw, ((0, 0), (0, 0), (ph, ph), (pw, pw)))
    cols = jnp.stack(
        [x_pad[:, :, kh:kh + Ho, kw:kw + Wo] for kh in range(KH) for kw in range(KW)],
        axis=0)                                                   # (KH*KW, N, Cin, Ho, Wo)
    patches = jnp.transpose(cols, (0, 2, 1, 3, 4)).reshape(K, NHW)
    patches = jnp.concatenate(
        [patches, jnp.ones((1, NHW), patches.dtype)], axis=0)     # (K+1, N*HW)

    # Weights flattened in matching (kh, kw, cin) order; bias appended as the last column.
    w_flat = jnp.transpose(w_oihw, (0, 2, 3, 1)).reshape(Cout, K)
    w_aug = jnp.concatenate(
        [w_flat, b.reshape(Cout, 1).astype(w_flat.dtype)], axis=1)  # (Cout, K+1)

    # Single kernel invocation, no grid: whole operands fit trivially in VMEM.
    out_flat = pl.pallas_call(
        _maxout_conv_kernel,
        out_shape=jax.ShapeDtypeStruct((1, NHW), x_nchw.dtype),
    )(patches, w_aug)

    # (1, N*Ho*Wo) with lanes ordered (n, ho, wo) -> (N, 1, Ho, Wo), matching
    # PyTorch's h.reshape(N, 1, H, W).
    return out_flat.reshape(N, Ho, Wo)[:, None, :, :]


def maxout_conv_ref(x_nchw, w_oihw, b, padding):
    """Pure-JAX reference matching the PyTorch module (is_norm=False)."""
    z = jax.lax.conv_general_dilated(
        x_nchw,
        w_oihw,
        window_strides=(1, 1),
        padding=((padding[0], padding[0]), (padding[1], padding[1])),
        dimension_numbers=("NCHW", "OIHW", "NCHW"),
    )
    z = z + b.reshape(1, -1, 1, 1)
    h = jnp.max(z, axis=1)          # torch.max(z, 1).values
    return h[:, None, :, :]         # reshape (N, 1, H, W)


if __name__ == "__main__":
    # MaxoutConv(in_channels=4, out_channels=8, kernel_size=(3,3), padding=(1,1))
    # applied to a (2, 4, 16, 16) input.
    key = jax.random.PRNGKey(0)
    k_x, k_w, k_b = jax.random.split(key, 3)

    N, Cin, H, W = 2, 4, 16, 16
    Cout, KH, KW = 8, 3, 3
    padding = (1, 1)

    x = jax.random.normal(k_x, (N, Cin, H, W), dtype=jnp.float32)
    # Deterministic param init (uniform, PyTorch-like fan-in bound); synthetic, no checkpoint.
    fan_in = Cin * KH * KW
    bound = 1.0 / np.sqrt(fan_in)
    w = jax.random.uniform(k_w, (Cout, Cin, KH, KW), minval=-bound, maxval=bound,
                           dtype=jnp.float32)
    b = jax.random.uniform(k_b, (Cout,), minval=-bound, maxval=bound, dtype=jnp.float32)

    out = jax.block_until_ready(maxout_conv(x, w, b, padding))
    ref = jax.block_until_ready(maxout_conv_ref(x, w, b, padding))

    assert out.shape == (N, 1, H, W), out.shape
    np.testing.assert_allclose(np.asarray(out), np.asarray(ref), rtol=1e-5, atol=1e-5)

    print("KERNEL_OK")
</pallas_src>

<mosaic_0001>
module attributes {stable_mosaic.version = 11 : i64} {
  func.func @_maxout_conv_kernel(%arg0: memref<37x512xf32, #tpu.memory_space<vmem>>, %arg1: memref<8x37xf32, #tpu.memory_space<vmem>>, %arg2: memref<1x512xf32, #tpu.memory_space<vmem>>) attributes {dimension_semantics = [], scalar_prefetch = 0 : i64, scratch_operands = 0 : i64, tpu.core_type = #tpu.core_type<tc>} {
    %c0 = arith.constant 0 : index
    %c0_0 = arith.constant 0 : index
    %0 = vector.load %arg1[%c0, %c0_0] : memref<8x37xf32, #tpu.memory_space<vmem>>, vector<8x37xf32>
    %c0_1 = arith.constant 0 : index
    %c0_2 = arith.constant 0 : index
    %1 = vector.load %arg0[%c0_1, %c0_2] : memref<37x512xf32, #tpu.memory_space<vmem>>, vector<37x512xf32>
    %cst = arith.constant dense<0.000000e+00> : vector<8x512xf32>
    %2 = tpu.matmul %0, %1, %cst {dimension_numbers = #tpu.dot_dimension_numbers<[1], [0], [0], [1], [0, 0, 1, 1], [], []>} : vector<8x37xf32>, vector<37x512xf32>, vector<8x512xf32> -> vector<8x512xf32>
    %cst_3 = arith.constant dense<0xFF800000> : vector<512xf32>
    %3 = vector.multi_reduction <maximumf>, %2, %cst_3 [0] : vector<8x512xf32> to vector<512xf32>
    %4 = vector.shape_cast %3 : vector<512xf32> to vector<1x512xf32>
    %c0_4 = arith.constant 0 : index
    %c0_5 = arith.constant 0 : index
    %5 = vector.load %arg2[%c0_4, %c0_5] : memref<1x512xf32, #tpu.memory_space<vmem>>, vector<1x512xf32>
    tpu.vector_store %arg2[%c0_4, %c0_5], %4 {strides = array<i32>} : memref<1x512xf32, #tpu.memory_space<vmem>>, vector<1x512xf32>,
    return
  }
}

</mosaic_0001>

<llo_original>
// kernel: tpu_custom_call.1
$region0: #{tpu_custom_call.1}
  #allocation0 [shape = 'u32[]', space=smem, size = 0x4, offset = 0x4, fixed_abs, tag = 'smem constant byte address 0x4 - core index']
  #allocation1 [shape = 'u32[144,128]{1,0:T(1,128)}', space=vmem, size = 0x12000, scoped, tag = 'internal scratch']
  %s0 = inlined_call_operand.hbm [shape: f32[37,512], index: 0, kind: input, shape index: {}]
  %s1 = inlined_call_operand.hbm [shape: f32[8,37], index: 1, kind: input, shape index: {}]
  %s2 = inlined_call_operand.hbm [shape: f32[1,512], index: 2, kind: output, shape index: {}]
  %s3 = sld [smem:[#allocation0]]
  $region26: #{tpu_custom_call.1} parent=0
    _
  %s5 = ssub.s32 1, %s3
  %s6 = scalar_select 0, %s5, %s3
  $region1: #{tpu_custom_call.1} parent=0
    #allocation2 [shape = 'u8[81920]{0}', space=vmem, size = 0x14000, scoped, tag = 'input window, operand 0, single buffered']
    #allocation3 [shape = 's32[1]{0}', space=sflag, size = 0x4, scoped, tag = 'scoped memory for tpu_custom_call.1']
    #allocation4 [shape = 's32[1]{0}', space=sflag, size = 0x4, scoped, tag = 'scoped memory for tpu_custom_call.1']
    #allocation5 [shape = 'u8[4096]{0}', space=vmem, size = 0x1000, scoped, tag = 'input window, operand 1, single buffered']
    #allocation6 [shape = 's32[1]{0}', space=sflag, size = 0x4, scoped, tag = 'scoped memory for tpu_custom_call.1']
    #allocation7 [shape = 'u8[2048]{0}', space=vmem, size = 0x800, scoped, tag = 'output window, operand 0, single buffered']
    %7 = vsyncpa [#allocation3], 0
    %8 = vsyncpa [#allocation6], 0
    %9 = vsyncpa [#allocation4], 0
    // Predicated region
    $region2: #{tpu_custom_call.1} parent=1 // pred_check
      _
    $region3: #{tpu_custom_call.1} parent=1 // pred_check_branch
      %11 = sbr.rel (0) target = $region5
    $region4: #{tpu_custom_call.1} parent=1 // pred_region
      %s13 = ssub.s32 2560, 2560
      %14 = vsyncadd [#allocation3], %s13
      %s15 = sshll.u32 [#allocation2], 4
      %s16 = int_to_ptr.vmem [resolvable:$true] %s15
      %21 = dma.hbm_to_vmem [thread:$0]  %s0, 2560, %s16, [#allocation3], 512, 512, 32
    $region5: #{tpu_custom_call.1} parent=1 // pred_fallthru
      _
    // Predicated region
    $region6: #{tpu_custom_call.1} parent=1 // pred_check
      _
    $region7: #{tpu_custom_call.1} parent=1 // pred_check_branch
      %23 = sbr.rel (0) target = $region9
    $region8: #{tpu_custom_call.1} parent=1 // pred_region
      %s25 = ssub.s32 128, 128
      %26 = vsyncadd [#allocation6], %s25
      %s28 = sshll.u32 [#allocation5], 4
      %s29 = int_to_ptr.vmem [resolvable:$true] %s28
      %31 = dma.hbm_to_vmem [thread:$0]  %s1, 128, %s29, [#allocation6]
    $region9: #{tpu_custom_call.1} parent=1 // pred_fallthru
      _
    // Predicated region
    $region10: #{tpu_custom_call.1} parent=1 // pred_check
      _
    $region11: #{tpu_custom_call.1} parent=1 // pred_check_branch
      %33 = sbr.rel (0) target = $region13
    $region12: #{tpu_custom_call.1} parent=1 // pred_region
      %34 = dma.done [#allocation3], 2560
    $region13: #{tpu_custom_call.1} parent=1 // pred_fallthru
      _
    // Predicated region
    $region14: #{tpu_custom_call.1} parent=1 // pred_check
      _
    $region15: #{tpu_custom_call.1} parent=1 // pred_check_branch
      %36 = sbr.rel (0) target = $region17
    $region16: #{tpu_custom_call.1} parent=1 // pred_region
      %37 = dma.done [#allocation6], 128
    $region17: #{tpu_custom_call.1} parent=1 // pred_fallthru
      _
    %v38 = vld [vmem:[#allocation5] sm:$0xff]
    %v39 = vld [vmem:[#allocation2] sm:$0xff]
    %v40 = vld [vmem:[#allocation2 + $0x8] sm:$0xff]
    %v41 = vld [vmem:[#allocation2 + $0x10] sm:$0xff]
    %v42 = vld [vmem:[#allocation2 + $0x18] sm:$0xff]
    %v43 = vld [vmem:[#allocation2 + $0x20] sm:$0xff]
    %v44 = vld [vmem:[#allocation2 + $0x28] sm:$0xff]
    %v45 = vld [vmem:[#allocation2 + $0x30] sm:$0xff]
    %v46 = vld [vmem:[#allocation2 + $0x38] sm:$0xff]
    %v47 = vld [vmem:[#allocation2 + $0x40] sm:$0xff]
    %v48 = vld [vmem:[#allocation2 + $0x48] sm:$0xff]
    %v49 = vld [vmem:[#allocation2 + $0x50] sm:$0xff]
    %v50 = vld [vmem:[#allocation2 + $0x58] sm:$0xff]
    %v51 = vld [vmem:[#allocation2 + $0x60] sm:$0xff]
    %v52 = vld [vmem:[#allocation2 + $0x68] sm:$0xff]
    %v53 = vld [vmem:[#allocation2 + $0x70] sm:$0xff]
    %v54 = vld [vmem:[#allocation2 + $0x78] sm:$0xff]
    %v55 = vld [vmem:[#allocation2 + $0x80] sm:$0x1f]
    %v56 = vld [vmem:[#allocation2 + $0x88] sm:$0x1f]
    %v57 = vld [vmem:[#allocation2 + $0x90] sm:$0x1f]
    %v58 = vld [vmem:[#allocation2 + $0x98] sm:$0x1f]
    %vm59 = vcmask 302080
    %v61 = vsel %vm59, %v38, 0
    %vm63 = vcmask 1044480
    %v65 = vsel %vm63, %v55, 0
    %v68 = vsel %vm63, %v56, 0
    %v71 = vsel %vm63, %v57, 0
    %v74 = vsel %vm63, %v58, 0
    %76 = vmatprep.subr.mxu0 %v40
    %77 = vmatpush1.msra.mxu0 %v39
    %78 = vmatprep.subr.mxu0 %v44
    %79 = vmatpush1.msra.mxu0 %v43
    %80 = vmatprep.subr.mxu0 %v48
    %81 = vmatpush1.msra.mxu0 %v47
    %82 = vmatprep.subr.mxu0 %v52
    %83 = vmatpush1.msra.mxu0 %v51
    %84 = vmatprep.subr.mxu0 %v68
    %85 = vmatpush1.msra.mxu0 %v65
    %86 = vmatprep.subr.mxu0 0.0
    %87 = vmatpush1.msra.mxu0 0.0
    %88 = vmatprep.subr.mxu0 0.0
    %89 = vmatpush1.msra.mxu0 0.0
    %90 = vmatprep.subr.mxu0 0.0
    %91 = vmatpush1.msra.mxu0 0.0
    %92 = vmatprep.subr.mxu0 0.0
    %93 = vmatpush1.msra.mxu0 0.0
    %94 = vmatprep.subr.mxu0 0.0
    %95 = vmatpush1.msra.mxu0 0.0
    %96 = vmatprep.subr.mxu0 0.0
    %97 = vmatpush1.msra.mxu0 0.0
    %98 = vmatprep.subr.mxu0 0.0
    %99 = vmatpush1.msra.mxu0 0.0
    %100 = vmatprep.subr.mxu0 0.0
    %101 = vmatpush1.msra.mxu0 0.0
    %102 = vmatprep.subr.mxu0 0.0
    %103 = vmatpush1.msra.mxu0 0.0
    %104 = vmatprep.subr.mxu0 0.0
    %105 = vmatpush1.msra.mxu0 0.0
    %106 = vmatprep.subr.mxu0 0.0
    %107 = vmatpush1.msra.mxu0 0.0
    %108 = vmatprep.subr.mxu0 0.0
    %109 = vmatpush1.msra.mxu0 0.0
    %110 = vmatprep.subr.mxu0 0.0
    %111 = vmatpush1.msra.mxu0 0.0
    %112 = vmatprep.subr.mxu0 0.0
    %113 = vmatpush1.msra.mxu0 0.0
    %114 = vmatprep.subr.mxu0 0.0
    %115 = vmatpush1.msra.mxu0 0.0
    %116 = vmatprep.subr.mxu0 0.0
    %117 = vmatpush1.msra.mxu0 0.0
    %118 = vmatprep.subr.mxu0 0.0
    %119 = vmatpush1.msra.mxu0 0.0
    %120 = vmatprep.subr.mxu0 0.0
    %121 = vmatpush1.msra.mxu0 0.0
    %122 = vmatprep.subr.mxu0 0.0
    %123 = vmatpush1.msra.mxu0 0.0
    %124 = vmatprep.subr.mxu0 0.0
    %125 = vmatpush1.msra.mxu0 0.0
    %126 = vmatprep.subr.mxu0 0.0
    %127 = vmatpush1.msra.mxu0 0.0
    %128 = vmatprep.subr.mxu0 0.0
    %129 = vmatpush1.msra.mxu0 0.0
    %130 = vmatprep.subr.mxu0 0.0
    %131 = vmatpush1.msra.mxu0 0.0
    %132 = vmatprep.subr.mxu0 0.0
    %133 = vmatpush1.msra.mxu0 0.0
    %134 = vmatprep.subr.mxu0 0.0
    %135 = vmatpush1.msra.mxu0 0.0
    %136 = vmatprep.subr.mxu0 0.0
    %137 = vmatpush1.msra.mxu0 0.0
    %138 = vmatprep.subr.mxu0 0.0
    %139 = vmatpush1.msra.mxu0 0.0
    %140 = vmatprep.mubr.f32.mxu0 0.0
    %141 = vmatmul.mubr.f32.gmra.mrb[0].mxu0 %v61
    %v142 = vpop.f32.mrb[0].mxu0
    %v143 = vadd.f32 0.0, %v142
    %v144 = vpop.f32.mrb[0].mxu0
    %v145 = vadd.f32 0.0, %v144
    %146 = vdwg.mxu0
    %147 = vmatprep.subr.mxu0 %v42
    %148 = vmatpush1.msra.mxu0 %v41
    %149 = vmatprep.subr.mxu0 %v46
    %150 = vmatpush1.msra.mxu0 %v45
    %151 = vmatprep.subr.mxu0 %v50
    %152 = vmatpush1.msra.mxu0 %v49
    %153 = vmatprep.subr.mxu0 %v54
    %154 = vmatpush1.msra.mxu0 %v53
    %155 = vmatprep.subr.mxu0 %v74
    %156 = vmatpush1.msra.mxu0 %v71
    %157 = vmatprep.subr.mxu0 0.0
    %158 = vmatpush1.msra.mxu0 0.0
    %159 = vmatprep.subr.mxu0 0.0
    %160 = vmatpush1.msra.mxu0 0.0
    %161 = vmatprep.subr.mxu0 0.0
    %162 = vmatpush1.msra.mxu0 0.0
    %163 = vmatprep.subr.mxu0 0.0
    %164 = vmatpush1.msra.mxu0 0.0
    %165 = vmatprep.subr.mxu0 0.0
    %166 = vmatpush1.msra.mxu0 0.0
    %167 = vmatprep.subr.mxu0 0.0
    %168 = vmatpush1.msra.mxu0 0.0
    %169 = vmatprep.subr.mxu0 0.0
    %170 = vmatpush1.msra.mxu0 0.0
    %171 = vmatprep.subr.mxu0 0.0
    %172 = vmatpush1.msra.mxu0 0.0
    %173 = vmatprep.subr.mxu0 0.0
    %174 = vmatpush1.msra.mxu0 0.0
    %175 = vmatprep.subr.mxu0 0.0
    %176 = vmatpush1.msra.mxu0 0.0
    %177 = vmatprep.subr.mxu0 0.0
    %178 = vmatpush1.msra.mxu0 0.0
    %179 = vmatprep.subr.mxu0 0.0
    %180 = vmatpush1.msra.mxu0 0.0
    %181 = vmatprep.subr.mxu0 0.0
    %182 = vmatpush1.msra.mxu0 0.0
    %183 = vmatprep.subr.mxu0 0.0
    %184 = vmatpush1.msra.mxu0 0.0
    %185 = vmatprep.subr.mxu0 0.0
    %186 = vmatpush1.msra.mxu0 0.0
    %187 = vmatprep.subr.mxu0 0.0
    %188 = vmatpush1.msra.mxu0 0.0
    %189 = vmatprep.subr.mxu0 0.0
    %190 = vmatpush1.msra.mxu0 0.0
    %191 = vmatprep.subr.mxu0 0.0
    %192 = vmatpush1.msra.mxu0 0.0
    %193 = vmatprep.subr.mxu0 0.0
    %194 = vmatpush1.msra.mxu0 0.0
    %195 = vmatprep.subr.mxu0 0.0
    %196 = vmatpush1.msra.mxu0 0.0
    %197 = vmatprep.subr.mxu0 0.0
    %198 = vmatpush1.msra.mxu0 0.0
    %199 = vmatprep.subr.mxu0 0.0
    %200 = vmatpush1.msra.mxu0 0.0
    %201 = vmatprep.subr.mxu0 0.0
    %202 = vmatpush1.msra.mxu0 0.0
    %203 = vmatprep.subr.mxu0 0.0
    %204 = vmatpush1.msra.mxu0 0.0
    %205 = vmatprep.subr.mxu0 0.0
    %206 = vmatpush1.msra.mxu0 0.0
    %207 = vmatprep.subr.mxu0 0.0
    %208 = vmatpush1.msra.mxu0 0.0
    %209 = vmatprep.subr.mxu0 0.0
    %210 = vmatpush1.msra.mxu0 0.0
    %211 = vmatprep.mubr.f32.mxu0 0.0
    %212 = vmatmul.mubr.f32.gmra.mrb[0].mxu0 %v61
    %v213 = vpop.f32.mrb[0].mxu0
    %v214 = vadd.f32 0.0, %v213
    %v215 = vpop.f32.mrb[0].mxu0
    %v216 = vadd.f32 0.0, %v215
    %217 = vdwg.mxu0
    %v218 = vrot.slane %v143, 4
    %v219 = vmax.f32 %v143, %v218
    %v220 = vrot.slane %v219, 2
    %v221 = vmax.f32 %v219, %v220
    %v222 = vrot.slane %v221, 1
    %v223 = vmax.f32 %v221, %v222
    %v224 = vrot.slane %v145, 4
    %v225 = vmax.f32 %v145, %v224
    %v226 = vrot.slane %v225, 2
    %v227 = vmax.f32 %v225, %v226
    %v228 = vrot.slane %v227, 1
    %v229 = vmax.f32 %v227, %v228
    %v230 = vrot.slane %v214, 4
    %v231 = vmax.f32 %v214, %v230
    %v232 = vrot.slane %v231, 2
    %v233 = vmax.f32 %v231, %v232
    %v234 = vrot.slane %v233, 1
    %v235 = vmax.f32 %v233, %v234
    %v236 = vrot.slane %v216, 4
    %v237 = vmax.f32 %v216, %v236
    %v238 = vrot.slane %v237, 2
    %v239 = vmax.f32 %v237, %v238
    %v240 = vrot.slane %v239, 1
    %v241 = vmax.f32 %v239, %v240
    %v246 = vcombine.low %v223, %v229
    %v247 = vcombine.low %v235, %v241
    %v249 = vunpack.c.l.s4 1966171168
    %v250 = vunpack.c.0.s8 %v249
    %v251 = vlaneseq
    %v252 = vshrl.u32 %v251, 7
    %v253 = vsub.s32 %v250, %v252
    %v254 = vrot.slane %v246, %v253
    %v256 = vunpack.c.l.s4 1966171168
    %v257 = vunpack.c.0.s8 %v256
    %v258 = vlaneseq
    %v259 = vshrl.u32 %v258, 7
    %v260 = vsub.s32 %v257, %v259
    %v261 = vrot.slane %v247, %v260
    %v262 = vcombine.low %v254, %v261
    %v264 = vunpack.c.l.s4 1966171168
    %v265 = vunpack.c.0.s8 %v264
    %v266 = vlaneseq
    %v267 = vshrl.u32 %v266, 7
    %v268 = vsub.s32 %v265, %v267
    %v269 = vrot.slane %v262, %v268
    %v271 = vlaneseq
    %vm272 = vcmp.ge.s32.totalorder %v271, 0
    %vm273 = vcmp.lt.s32.totalorder %v271, 512
    %vm274 = vmand %vm272, %vm273
    %275 = vst.msk [vmem:[#allocation7] sm:$0xf] %vm274, %v269
    // Predicated region
    $region18: #{tpu_custom_call.1} parent=1 // pred_check
      _
    $region19: #{tpu_custom_call.1} parent=1 // pred_check_branch
      %277 = sbr.rel (0) target = $region21
    $region20: #{tpu_custom_call.1} parent=1 // pred_region
      %s279 = ssub.s32 64, 64
      %280 = vsyncadd [#allocation4], %s279
      %s282 = sshll.u32 [#allocation7], 4
      %s283 = int_to_ptr.vmem [resolvable:$true] %s282
      %285 = dma.vmem_to_hbm [thread:$0]  %s283, 64, %s2, [#allocation4]
    $region21: #{tpu_custom_call.1} parent=1 // pred_fallthru
      _
    // Predicated region
    $region22: #{tpu_custom_call.1} parent=1 // pred_check
      _
    $region23: #{tpu_custom_call.1} parent=1 // pred_check_branch
      %287 = sbr.rel (0) target = $region25
    $region24: #{tpu_custom_call.1} parent=1 // pred_region
      %288 = dma.done [#allocation4], 64
    $region25: #{tpu_custom_call.1} parent=1 // pred_fallthru
      _
    %289 = vsyncpa [#allocation3], 1
    %290 = vsyncpa [#allocation6], 1
    %291 = vsyncpa [#allocation4], 1

</llo_original>
